<compile_context>
chip_gen: v7x
topology: tpu7x:2x2x1
jax: 0.10.0
libtpu: 0.0.40
codegen_flags: <defaults>
</compile_context>

<pallas_src>
import functools

import jax
import jax.numpy as jnp
from jax.experimental import pallas as pl
from jax.experimental.pallas import tpu as pltpu


def _round_up(x, m):
    return (x + m - 1) // m * m


# --------------------------------------------------------------------------
# Kernel
# --------------------------------------------------------------------------
def _pwff_kernel(x_ref, gamma_ref, beta_ref, w1_ref, b1_ref, w2_ref, b2_ref,
                 o_ref, xn_ref, acc_ref, *, d_real, d_pad):
    k = pl.program_id(1)

    # --- once per row tile: LayerNorm, stash bf16 x_norm, zero accumulator ---
    @pl.when(k == 0)
    def _():
        x = x_ref[...].astype(jnp.float32)
        inv_d = 1.0 / d_real
        mean = jnp.sum(x, axis=-1, keepdims=True) * inv_d
        centered = x - mean
        if d_pad != d_real:  # static branch: mask padded feature columns
            col = jax.lax.broadcasted_iota(jnp.int32, (1, d_pad), 1)
            centered = jnp.where(col < d_real, centered, 0.0)
        var = jnp.sum(centered * centered, axis=-1, keepdims=True) * inv_d
        xn = centered * jax.lax.rsqrt(var + 1e-6)   # module uses eps=1e-06
        xn = xn * gamma_ref[...] + beta_ref[...]
        xn_ref[...] = xn.astype(jnp.bfloat16)
        acc_ref[...] = jnp.zeros_like(acc_ref)

    # --- per FF tile: Linear1 slice + ReLU, accumulate Linear2 slice ---
    h = jnp.dot(xn_ref[...], w1_ref[...], preferred_element_type=jnp.float32)
    h = jnp.maximum(h + b1_ref[...], 0.0)
    acc_ref[...] += jnp.dot(h.astype(jnp.bfloat16), w2_ref[...],
                            preferred_element_type=jnp.float32)

    # --- once per row tile: bias + residual, emit lane-dense output ---
    @pl.when(k == pl.num_programs(1) - 1)
    def _():
        o_ref[...] = (acc_ref[...] + b2_ref[...] +
                      x_ref[...].astype(jnp.float32)).astype(o_ref.dtype)


# --------------------------------------------------------------------------
# Tile-size / VMEM heuristics
# --------------------------------------------------------------------------
def _vmem_limit_bytes():
    cap = 64 * 1024 * 1024
    try:
        cap = int(pltpu.get_tpu_info().vmem_capacity_bytes)
    except Exception:
        pass
    # ~75% of physical VMEM, capped at 100 MiB (v5e/v6e: ~96 MiB, v7x: 48 MiB)
    return min(cap * 3 // 4, 100 * 1024 * 1024)


def _pick_tf(ffp, requested):
    """Largest 128-multiple divisor of the padded FF dim that is <= requested."""
    best = 128
    t = 128
    while t <= ffp:
        if ffp % t == 0 and t <= requested:
            best = t
        t += 128
    return best


def _pick_tm(n, requested):
    """Row tile: multiple of 256 when rows allow (MXU-friendly on v6e/v7x),
    capped so padded-row waste stays small for short-sequence calls."""
    n16 = _round_up(n, 16)
    if n16 <= 256:
        return n16                               # single small 16-aligned tile
    tm = 256
    while tm * 2 <= requested and _round_up(n, tm * 2) - n <= n // 8:
        tm *= 2
    if _round_up(n, tm) - n > n // 8 and n16 <= max(requested, 256):
        tm = n16                                 # one near-exact covering tile
    return tm


def _fit_tiles_to_vmem(tm, tf, dp, ffp, x_bytes, out_bytes, budget):
    """Shrink tf (then tm) until the resident VMEM estimate fits the budget."""
    def est(tm_, tf_):
        return (2 * tm_ * dp * x_bytes          # x tile, double-buffered
                + 2 * tm_ * dp * out_bytes      # out tile, double-buffered
                + tm_ * dp * (2 + 4)            # xn (bf16) + acc (f32) scratch
                + 2 * 2 * dp * tf_ * 2          # w1 + w2 slices (bf16, 2-buf)
                + tm_ * tf_ * 4                 # h intermediate (f32)
                + 16 * (dp + tf_) * 4)          # biases / gamma / beta + slack
    for _ in range(32):
        if est(tm, tf) <= budget:
            break
        new_tf = _pick_tf(ffp, tf // 2) if tf > 128 else tf
        if new_tf < tf:
            tf = new_tf
        elif tm > 256:
            tm = max(256, tm // 2)
        else:
            break
    return tm, tf


# --------------------------------------------------------------------------
# One-time weight preparation (hoisted out of the per-call path)
# --------------------------------------------------------------------------
def prepare_pwff_params(gamma, beta, w1, b1, w2, b2):
    """Pad all params to 128-multiples and cast weights to bf16 ONCE.

    w1: (D, FF), w2: (FF, D) (transposed vs. torch Linear.weight).
    Returns a tuple consumed by positionwise_feed_forward.
    """
    D, FF = w1.shape
    Dp = _round_up(D, 128)
    FFp = _round_up(FF, 128)
    gamma2 = jnp.pad(gamma.astype(jnp.float32), (0, Dp - D)).reshape(1, Dp)
    beta2 = jnp.pad(beta.astype(jnp.float32), (0, Dp - D)).reshape(1, Dp)
    w1p = jnp.pad(w1, ((0, Dp - D), (0, FFp - FF))).astype(jnp.bfloat16)
    b1p = jnp.pad(b1.astype(jnp.float32), (0, FFp - FF)).reshape(1, FFp)
    w2p = jnp.pad(w2, ((0, FFp - FF), (0, Dp - D))).astype(jnp.bfloat16)
    b2p = jnp.pad(b2.astype(jnp.float32), (0, Dp - D)).reshape(1, Dp)
    return gamma2, beta2, w1p, b1p, w2p, b2p


# --------------------------------------------------------------------------
# Forward wrapper
# --------------------------------------------------------------------------
def positionwise_feed_forward(x, gamma2, beta2, w1p, b1p, w2p, b2p, *,
                              tm=1024, tf=2048):
    """x: [B, S, D]; remaining args come from prepare_pwff_params().
    Pass bf16 x to halve activation HBM/VMEM traffic; output dtype == x.dtype."""
    B, S, D = x.shape
    Dp, FFp = w1p.shape           # padded dims are baked into the prepared weights
    assert Dp >= D and Dp % 128 == 0 and FFp % 128 == 0
    N = B * S

    x_bytes = jnp.dtype(x.dtype).itemsize
    tm = _pick_tm(N, tm)
    tf = _pick_tf(FFp, tf)
    tm, tf = _fit_tiles_to_vmem(tm, tf, Dp, FFp, x_bytes, x_bytes,
                                _vmem_limit_bytes())
    Np = _round_up(N, tm)

    x2 = jnp.pad(x.reshape(N, D), ((0, Np - N), (0, Dp - D)))

    kernel = functools.partial(_pwff_kernel, d_real=D, d_pad=Dp)

    out = pl.pallas_call(
        kernel,
        out_shape=jax.ShapeDtypeStruct((Np, Dp), x.dtype),
        grid_spec=pltpu.PrefetchScalarGridSpec(
            num_scalar_prefetch=0,
            grid=(Np // tm, FFp // tf),
            in_specs=[
                pl.BlockSpec((tm, Dp), lambda i, k: (i, 0)),   # x rows
                pl.BlockSpec((1, Dp), lambda i, k: (0, 0)),    # gamma
                pl.BlockSpec((1, Dp), lambda i, k: (0, 0)),    # beta
                pl.BlockSpec((Dp, tf), lambda i, k: (0, k)),   # w1 FF-slice
                pl.BlockSpec((1, tf), lambda i, k: (0, k)),    # b1 FF-slice
                pl.BlockSpec((tf, Dp), lambda i, k: (k, 0)),   # w2 FF-slice
                pl.BlockSpec((1, Dp), lambda i, k: (0, 0)),    # b2
            ],
            out_specs=pl.BlockSpec((tm, Dp), lambda i, k: (i, 0)),
            scratch_shapes=[
                pltpu.VMEM((tm, Dp), jnp.bfloat16),   # x_norm (bf16 MXU feed)
                pltpu.VMEM((tm, Dp), jnp.float32),    # f32 accumulator
            ],
        ),
        compiler_params=pltpu.CompilerParams(
            dimension_semantics=("parallel", "arbitrary"),
            vmem_limit_bytes=_vmem_limit_bytes(),
        ),
    )(x2, gamma2, beta2, w1p, b1p, w2p, b2p)

    return out[:N, :D].reshape(B, S, D)


# --------------------------------------------------------------------------
# Pure-JAX reference (f32) for correctness checking
# --------------------------------------------------------------------------
def _reference(x, gamma, beta, w1, b1, w2, b2):
    xf = x.astype(jnp.float32)
    mean = jnp.mean(xf, axis=-1, keepdims=True)
    var = jnp.mean((xf - mean) ** 2, axis=-1, keepdims=True)
    xn = (xf - mean) * jax.lax.rsqrt(var + 1e-6) * gamma + beta
    h = jnp.maximum(xn @ w1 + b1, 0.0)
    y = h @ w2 + b2
    return (y + xf).astype(x.dtype)


if __name__ == "__main__":
    # Small shapes consistent with the module: batch=2, seq=8, input_size=32,
    # ff_size=64.
    B, S, D, FF = 2, 8, 32, 64

    key = jax.random.PRNGKey(0)
    kx, kw1, kb1, kw2, kb2 = jax.random.split(key, 5)

    x = jax.random.normal(kx, (B, S, D), dtype=jnp.float32)

    # LayerNorm params (PyTorch default init: weight=1, bias=0)
    gamma = jnp.ones((D,), jnp.float32)
    beta = jnp.zeros((D,), jnp.float32)

    # Linear params, stored transposed for row-major matmul: (in, out)
    w1 = jax.random.normal(kw1, (D, FF), dtype=jnp.float32) * 0.1
    b1 = jax.random.normal(kb1, (FF,), dtype=jnp.float32) * 0.1
    w2 = jax.random.normal(kw2, (FF, D), dtype=jnp.float32) * 0.1
    b2 = jax.random.normal(kb2, (D,), dtype=jnp.float32) * 0.1

    # One-time weight preparation (pad + bf16 cast), hoisted out of the call.
    prepared = prepare_pwff_params(gamma, beta, w1, b1, w2, b2)
    prepared = jax.block_until_ready(prepared)

    fwd = jax.jit(positionwise_feed_forward)
    out = fwd(x, *prepared)
    out = jax.block_until_ready(out)

    ref = _reference(x, gamma, beta, w1, b1, w2, b2)
    assert out.shape == x.shape
    # bf16 MXU operands (f32 accumulation) -> allow ~1e-2 relative error.
    assert jnp.allclose(out, ref, atol=3e-2, rtol=3e-2), \
        float(jnp.max(jnp.abs(out - ref)))

    # TODO(synk): nn.Dropout is modeled as eval-mode identity (inference path).
    print("KERNEL_OK")
</pallas_src>

<mosaic_0001>
module attributes {stable_mosaic.version = 11 : i64} {
  func.func @_pwff_kernel(%arg0: i32, %arg1: i32, %arg2: memref<16x128xf32, #tpu.memory_space<vmem>>, %arg3: memref<1x128xf32, #tpu.memory_space<vmem>>, %arg4: memref<1x128xf32, #tpu.memory_space<vmem>>, %arg5: memref<128x128xbf16, #tpu.memory_space<vmem>>, %arg6: memref<1x128xf32, #tpu.memory_space<vmem>>, %arg7: memref<128x128xbf16, #tpu.memory_space<vmem>>, %arg8: memref<1x128xf32, #tpu.memory_space<vmem>>, %arg9: memref<16x128xf32, #tpu.memory_space<vmem>>, %arg10: memref<16x128xbf16, #tpu.memory_space<vmem>>, %arg11: memref<16x128xf32, #tpu.memory_space<vmem>>) attributes {dimension_semantics = [#tpu.dimension_semantics<parallel>, #tpu.dimension_semantics<arbitrary>], iteration_bounds = array<i64: 1, 1>, scalar_prefetch = 0 : i64, scratch_operands = 2 : i64, tpu.core_type = #tpu.core_type<tc>, window_params = [{transform_indices = @transform_0, window_bounds = array<i64: 16, 128>}, {pipeline_mode = #tpu.pipeline_mode<synchronous>, transform_indices = @transform_1, window_bounds = array<i64: 1, 128>}, {pipeline_mode = #tpu.pipeline_mode<synchronous>, transform_indices = @transform_2, window_bounds = array<i64: 1, 128>}, {transform_indices = @transform_3, window_bounds = array<i64: 128, 128>}, {transform_indices = @transform_4, window_bounds = array<i64: 1, 128>}, {transform_indices = @transform_5, window_bounds = array<i64: 128, 128>}, {pipeline_mode = #tpu.pipeline_mode<synchronous>, transform_indices = @transform_6, window_bounds = array<i64: 1, 128>}, {transform_indices = @transform_7, window_bounds = array<i64: 16, 128>}]} {
    %c0_i32 = arith.constant 0 : i32
    %0 = arith.cmpi eq, %arg1, %c0_i32 : i32
    %1 = arith.extui %0 : i1 to i32
    %c0_i32_0 = arith.constant 0 : i32
    %2 = arith.cmpi ne, %1, %c0_i32_0 : i32
    scf.if %2 {
      %c0_16 = arith.constant 0 : index
      %c0_17 = arith.constant 0 : index
      %20 = vector.load %arg2[%c0_16, %c0_17] : memref<16x128xf32, #tpu.memory_space<vmem>>, vector<16x128xf32>
      %cst_18 = arith.constant dense<0.000000e+00> : vector<16xf32>
      %21 = vector.multi_reduction <add>, %20, %cst_18 [1] : vector<16x128xf32> to vector<16xf32>
      %22 = vector.shape_cast %21 : vector<16xf32> to vector<16x1xf32>
      %cst_19 = arith.constant 3.125000e-02 : f32
      %23 = vector.broadcast %cst_19 : f32 to vector<16x1xf32>
      %24 = arith.mulf %22, %23 : vector<16x1xf32>
      %25 = vector.broadcast %24 : vector<16x1xf32> to vector<16x128xf32>
      %26 = arith.subf %20, %25 : vector<16x128xf32>
      %27 = tpu.iota {dimensions = array<i32: 1>} : vector<1x128xi32>
      %c32_i32 = arith.constant 32 : i32
      %28 = vector.broadcast %c32_i32 : i32 to vector<1x128xi32>
      %29 = arith.cmpi slt, %27, %28 : vector<1x128xi32>
      %cst_20 = arith.constant 0.000000e+00 : f32
      %30 = vector.shape_cast %29 : vector<1x128xi1> to vector<1x128xi1>
      %31 = vector.broadcast %30 : vector<1x128xi1> to vector<16x128xi1>
      %32 = vector.broadcast %cst_20 : f32 to vector<16x128xf32>
      %33 = arith.select %31, %26, %32 : vector<16x128xi1>, vector<16x128xf32>
      %34 = arith.mulf %33, %33 : vector<16x128xf32>
      %cst_21 = arith.constant dense<0.000000e+00> : vector<16xf32>
      %35 = vector.multi_reduction <add>, %34, %cst_21 [1] : vector<16x128xf32> to vector<16xf32>
      %36 = vector.shape_cast %35 : vector<16xf32> to vector<16x1xf32>
      %cst_22 = arith.constant 3.125000e-02 : f32
      %37 = vector.broadcast %cst_22 : f32 to vector<16x1xf32>
      %38 = arith.mulf %36, %37 : vector<16x1xf32>
      %cst_23 = arith.constant 9.99999997E-7 : f32
      %39 = vector.broadcast %cst_23 : f32 to vector<16x1xf32>
      %40 = arith.addf %38, %39 : vector<16x1xf32>
      %41 = math.rsqrt %40 : vector<16x1xf32>
      %42 = vector.broadcast %41 : vector<16x1xf32> to vector<16x128xf32>
      %43 = arith.mulf %33, %42 : vector<16x128xf32>
      %c0_24 = arith.constant 0 : index
      %c0_25 = arith.constant 0 : index
      %44 = vector.load %arg3[%c0_24, %c0_25] : memref<1x128xf32, #tpu.memory_space<vmem>>, vector<1x128xf32>
      %45 = vector.broadcast %44 : vector<1x128xf32> to vector<16x128xf32>
      %46 = arith.mulf %43, %45 : vector<16x128xf32>
      %c0_26 = arith.constant 0 : index
      %c0_27 = arith.constant 0 : index
      %47 = vector.load %arg4[%c0_26, %c0_27] : memref<1x128xf32, #tpu.memory_space<vmem>>, vector<1x128xf32>
      %48 = vector.broadcast %47 : vector<1x128xf32> to vector<16x128xf32>
      %49 = arith.addf %46, %48 : vector<16x128xf32>
      %50 = arith.truncf %49 : vector<16x128xf32> to vector<16x128xbf16>
      %c0_28 = arith.constant 0 : index
      %c0_29 = arith.constant 0 : index
      %51 = vector.load %arg10[%c0_28, %c0_29] : memref<16x128xbf16, #tpu.memory_space<vmem>>, vector<16x128xbf16>
      tpu.vector_store %arg10[%c0_28, %c0_29], %50 {strides = array<i32>} : memref<16x128xbf16, #tpu.memory_space<vmem>>, vector<16x128xbf16>,
      %cst_30 = arith.constant 0.000000e+00 : f32
      %52 = vector.broadcast %cst_30 : f32 to vector<16x128xf32>
      %c0_31 = arith.constant 0 : index
      %c0_32 = arith.constant 0 : index
      %53 = vector.load %arg11[%c0_31, %c0_32] : memref<16x128xf32, #tpu.memory_space<vmem>>, vector<16x128xf32>
      tpu.vector_store %arg11[%c0_31, %c0_32], %52 {strides = array<i32>} : memref<16x128xf32, #tpu.memory_space<vmem>>, vector<16x128xf32>,
    } else {
    }
    %c0 = arith.constant 0 : index
    %c0_1 = arith.constant 0 : index
    %3 = vector.load %arg10[%c0, %c0_1] : memref<16x128xbf16, #tpu.memory_space<vmem>>, vector<16x128xbf16>
    %c0_2 = arith.constant 0 : index
    %c0_3 = arith.constant 0 : index
    %4 = vector.load %arg5[%c0_2, %c0_3] : memref<128x128xbf16, #tpu.memory_space<vmem>>, vector<128x128xbf16>
    %cst = arith.constant dense<0.000000e+00> : vector<16x128xf32>
    %5 = tpu.matmul %3, %4, %cst {dimension_numbers = #tpu.dot_dimension_numbers<[1], [0], [0], [1], [0, 0, 1, 1], [], []>} : vector<16x128xbf16>, vector<128x128xbf16>, vector<16x128xf32> -> vector<16x128xf32>
    %c0_4 = arith.constant 0 : index
    %c0_5 = arith.constant 0 : index
    %6 = vector.load %arg6[%c0_4, %c0_5] : memref<1x128xf32, #tpu.memory_space<vmem>>, vector<1x128xf32>
    %7 = vector.broadcast %6 : vector<1x128xf32> to vector<16x128xf32>
    %8 = arith.addf %5, %7 : vector<16x128xf32>
    %cst_6 = arith.constant 0.000000e+00 : f32
    %9 = vector.broadcast %cst_6 : f32 to vector<16x128xf32>
    %10 = arith.maximumf %8, %9 : vector<16x128xf32>
    %c0_7 = arith.constant 0 : index
    %c0_8 = arith.constant 0 : index
    %11 = vector.load %arg11[%c0_7, %c0_8] : memref<16x128xf32, #tpu.memory_space<vmem>>, vector<16x128xf32>
    %12 = arith.truncf %10 : vector<16x128xf32> to vector<16x128xbf16>
    %c0_9 = arith.constant 0 : index
    %c0_10 = arith.constant 0 : index
    %13 = vector.load %arg7[%c0_9, %c0_10] : memref<128x128xbf16, #tpu.memory_space<vmem>>, vector<128x128xbf16>
    %cst_11 = arith.constant dense<0.000000e+00> : vector<16x128xf32>
    %14 = tpu.matmul %12, %13, %cst_11 {dimension_numbers = #tpu.dot_dimension_numbers<[1], [0], [0], [1], [0, 0, 1, 1], [], []>} : vector<16x128xbf16>, vector<128x128xbf16>, vector<16x128xf32> -> vector<16x128xf32>
    %15 = arith.addf %11, %14 : vector<16x128xf32>
    %c0_12 = arith.constant 0 : index
    %c0_13 = arith.constant 0 : index
    %16 = vector.load %arg11[%c0_12, %c0_13] : memref<16x128xf32, #tpu.memory_space<vmem>>, vector<16x128xf32>
    tpu.vector_store %arg11[%c0_12, %c0_13], %15 {strides = array<i32>} : memref<16x128xf32, #tpu.memory_space<vmem>>, vector<16x128xf32>,
    %c0_i32_14 = arith.constant 0 : i32
    %17 = arith.cmpi eq, %arg1, %c0_i32_14 : i32
    %18 = arith.extui %17 : i1 to i32
    %c0_i32_15 = arith.constant 0 : i32
    %19 = arith.cmpi ne, %18, %c0_i32_15 : i32
    scf.if %19 {
      %c0_16 = arith.constant 0 : index
      %c0_17 = arith.constant 0 : index
      %20 = vector.load %arg11[%c0_16, %c0_17] : memref<16x128xf32, #tpu.memory_space<vmem>>, vector<16x128xf32>
      %c0_18 = arith.constant 0 : index
      %c0_19 = arith.constant 0 : index
      %21 = vector.load %arg8[%c0_18, %c0_19] : memref<1x128xf32, #tpu.memory_space<vmem>>, vector<1x128xf32>
      %22 = vector.broadcast %21 : vector<1x128xf32> to vector<16x128xf32>
      %23 = arith.addf %20, %22 : vector<16x128xf32>
      %c0_20 = arith.constant 0 : index
      %c0_21 = arith.constant 0 : index
      %24 = vector.load %arg2[%c0_20, %c0_21] : memref<16x128xf32, #tpu.memory_space<vmem>>, vector<16x128xf32>
      %25 = arith.addf %23, %24 : vector<16x128xf32>
      %c0_22 = arith.constant 0 : index
      %c0_23 = arith.constant 0 : index
      %26 = vector.load %arg9[%c0_22, %c0_23] : memref<16x128xf32, #tpu.memory_space<vmem>>, vector<16x128xf32>
      tpu.vector_store %arg9[%c0_22, %c0_23], %25 {strides = array<i32>} : memref<16x128xf32, #tpu.memory_space<vmem>>, vector<16x128xf32>,
    } else {
    }
    return
  }
  func.func @transform_0(%arg0: i32, %arg1: i32) -> (i32, i32) {
    %c0_i32 = arith.constant 0 : i32
    %c0_i32_0 = arith.constant 0 : i32
    return %arg0, %c0_i32 : i32, i32
  }
  func.func @transform_1(%arg0: i32, %arg1: i32) -> (i32, i32) {
    %c0_i32 = arith.constant 0 : i32
    %c0_i32_0 = arith.constant 0 : i32
    %c0_i32_1 = arith.constant 0 : i32
    return %c0_i32, %c0_i32_0 : i32, i32
  }
  func.func @transform_2(%arg0: i32, %arg1: i32) -> (i32, i32) {
    %c0_i32 = arith.constant 0 : i32
    %c0_i32_0 = arith.constant 0 : i32
    %c0_i32_1 = arith.constant 0 : i32
    return %c0_i32, %c0_i32_0 : i32, i32
  }
  func.func @transform_3(%arg0: i32, %arg1: i32) -> (i32, i32) {
    %c0_i32 = arith.constant 0 : i32
    %c0_i32_0 = arith.constant 0 : i32
    return %c0_i32, %arg1 : i32, i32
  }
  func.func @transform_4(%arg0: i32, %arg1: i32) -> (i32, i32) {
    %c0_i32 = arith.constant 0 : i32
    %c0_i32_0 = arith.constant 0 : i32
    return %c0_i32, %arg1 : i32, i32
  }
  func.func @transform_5(%arg0: i32, %arg1: i32) -> (i32, i32) {
    %c0_i32 = arith.constant 0 : i32
    %c0_i32_0 = arith.constant 0 : i32
    return %arg1, %c0_i32 : i32, i32
  }
  func.func @transform_6(%arg0: i32, %arg1: i32) -> (i32, i32) {
    %c0_i32 = arith.constant 0 : i32
    %c0_i32_0 = arith.constant 0 : i32
    %c0_i32_1 = arith.constant 0 : i32
    return %c0_i32, %c0_i32_0 : i32, i32
  }
  func.func @transform_7(%arg0: i32, %arg1: i32) -> (i32, i32) {
    %c0_i32 = arith.constant 0 : i32
    %c0_i32_0 = arith.constant 0 : i32
    return %arg0, %c0_i32 : i32, i32
  }
}

</mosaic_0001>

<llo_original>
// kernel: positionwise_feed_forward.1
$region0: #{positionwise_feed_forward.1}
  #allocation0 [shape = 'u32[]', space=smem, size = 0x4, offset = 0x4, fixed_abs, tag = 'smem constant byte address 0x4 - core index']
  #allocation1 [shape = 'u32[144,128]{1,0:T(1,128)}', space=vmem, size = 0x12000, scoped, tag = 'internal scratch']
  #allocation2 [shape = 'bf16[16,128]{1,0:T(16,128)(2,1)}', space=vmem, size = 0x1000, scoped, tag = 'scratch operand']
  #allocation3 [shape = 'f32[16,128]{1,0:T(8,128)}', space=vmem, size = 0x2000, scoped, tag = 'scratch operand']
  %s0 = inlined_call_operand.vmem [shape: f32[16,128], index: 0, kind: input, shape index: {}]
  %s1 = inlined_call_operand.vmem [shape: f32[1,128], index: 1, kind: input, shape index: {}]
  %s2 = inlined_call_operand.vmem [shape: f32[1,128], index: 2, kind: input, shape index: {}]
  %s3 = inlined_call_operand.hbm [shape: bf16[128,128], index: 3, kind: input, shape index: {}]
  %s4 = inlined_call_operand.vmem [shape: f32[1,128], index: 4, kind: input, shape index: {}]
  %s5 = inlined_call_operand.hbm [shape: bf16[128,128], index: 5, kind: input, shape index: {}]
  %s6 = inlined_call_operand.vmem [shape: f32[1,128], index: 6, kind: input, shape index: {}]
  %s7 = inlined_call_operand.vmem [shape: f32[16,128], index: 7, kind: output, shape index: {}]
  %s8 = sld [smem:[#allocation0]]
  $region54: #{positionwise_feed_forward.1} parent=0
    _
  %s10 = ssub.s32 1, %s8
  %s11 = scalar_select 0, %s10, %s8
  $region1: #{positionwise_feed_forward.1} parent=0
    #allocation4 [shape = 'u8[32768]{0}', space=vmem, size = 0x8000, scoped, tag = 'input window, operand 3, single buffered']
    #allocation5 [shape = 's32[1]{0}', space=sflag, size = 0x4, scoped, tag = 'scoped memory for positionwise_feed_forward.1']
    #allocation6 [shape = 'u8[32768]{0}', space=vmem, size = 0x8000, scoped, tag = 'input window, operand 5, single buffered']
    #allocation7 [shape = 's32[1]{0}', space=sflag, size = 0x4, scoped, tag = 'scoped memory for positionwise_feed_forward.1']
    %12 = vsyncpa [#allocation5], 0
    %13 = vsyncpa [#allocation7], 0
    // Predicated region
    $region2: #{positionwise_feed_forward.1} parent=1 // pred_check
      _
    $region3: #{positionwise_feed_forward.1} parent=1 // pred_check_branch
      %15 = sbr.rel (0) target = $region5
    $region4: #{positionwise_feed_forward.1} parent=1 // pred_region
      _
    $region5: #{positionwise_feed_forward.1} parent=1 // pred_fallthru
      _
    // Predicated region
    $region6: #{positionwise_feed_forward.1} parent=1 // pred_check
      _
    $region7: #{positionwise_feed_forward.1} parent=1 // pred_check_branch
      %17 = sbr.rel (0) target = $region9
    $region8: #{positionwise_feed_forward.1} parent=1 // pred_region
      _
    $region9: #{positionwise_feed_forward.1} parent=1 // pred_fallthru
      _
    // Predicated region
    $region10: #{positionwise_feed_forward.1} parent=1 // pred_check
      _
    $region11: #{positionwise_feed_forward.1} parent=1 // pred_check_branch
      %19 = sbr.rel (0) target = $region13
    $region12: #{positionwise_feed_forward.1} parent=1 // pred_region
      _
    $region13: #{positionwise_feed_forward.1} parent=1 // pred_fallthru
      _
    // Predicated region
    $region14: #{positionwise_feed_forward.1} parent=1 // pred_check
      _
    $region15: #{positionwise_feed_forward.1} parent=1 // pred_check_branch
      %21 = sbr.rel (0) target = $region17
    $region16: #{positionwise_feed_forward.1} parent=1 // pred_region
      %s23 = ssub.s32 1024, 1024
      %24 = vsyncadd [#allocation5], %s23
      %s25 = sshll.u32 [#allocation4], 4
      %s26 = int_to_ptr.vmem [resolvable:$true] %s25
      %31 = dma.hbm_to_vmem [thread:$0]  %s3, 1024, %s26, [#allocation5], 64, 64, 4
    $region17: #{positionwise_feed_forward.1} parent=1 // pred_fallthru
      _
    // Predicated region
    $region18: #{positionwise_feed_forward.1} parent=1 // pred_check
      _
    $region19: #{positionwise_feed_forward.1} parent=1 // pred_check_branch
      %33 = sbr.rel (0) target = $region21
    $region20: #{positionwise_feed_forward.1} parent=1 // pred_region
      _
    $region21: #{positionwise_feed_forward.1} parent=1 // pred_fallthru
      _
    // Predicated region
    $region22: #{positionwise_feed_forward.1} parent=1 // pred_check
      _
    $region23: #{positionwise_feed_forward.1} parent=1 // pred_check_branch
      %35 = sbr.rel (0) target = $region25
    $region24: #{positionwise_feed_forward.1} parent=1 // pred_region
      %s37 = ssub.s32 1024, 1024
      %38 = vsyncadd [#allocation7], %s37
      %s39 = sshll.u32 [#allocation6], 4
      %s40 = int_to_ptr.vmem [resolvable:$true] %s39
      %45 = dma.hbm_to_vmem [thread:$0]  %s5, 1024, %s40, [#allocation7], 64, 64, 4
    $region25: #{positionwise_feed_forward.1} parent=1 // pred_fallthru
      _
    // Predicated region
    $region26: #{positionwise_feed_forward.1} parent=1 // pred_check
      _
    $region27: #{positionwise_feed_forward.1} parent=1 // pred_check_branch
      %47 = sbr.rel (0) target = $region29
    $region28: #{positionwise_feed_forward.1} parent=1 // pred_region
      _
    $region29: #{positionwise_feed_forward.1} parent=1 // pred_fallthru
      _
    // Predicated region
    $region30: #{positionwise_feed_forward.1} parent=1 // pred_check
      _
    $region31: #{positionwise_feed_forward.1} parent=1 // pred_check_branch
      %49 = sbr.rel (0) target = $region33
    $region32: #{positionwise_feed_forward.1} parent=1 // pred_region
      %50 = dma.done [#allocation5], 1024
    $region33: #{positionwise_feed_forward.1} parent=1 // pred_fallthru
      _
    // Predicated region
    $region34: #{positionwise_feed_forward.1} parent=1 // pred_check
      _
    $region35: #{positionwise_feed_forward.1} parent=1 // pred_check_branch
      %52 = sbr.rel (0) target = $region37
    $region36: #{positionwise_feed_forward.1} parent=1 // pred_region
      %53 = dma.done [#allocation7], 1024
    $region37: #{positionwise_feed_forward.1} parent=1 // pred_fallthru
      _
    %p55 = scmp.eq.s32.totalorder 0, 0
    // Predicated region
    $region38: #{positionwise_feed_forward.1} parent=1 // pred_check
      %p56 = pneg %p55
    $region39: #{positionwise_feed_forward.1} parent=1 // pred_check_branch
      %58 = sbr.rel (%p56) target = $region41
    $region40: #{positionwise_feed_forward.1} parent=1 // pred_region
      %v59 = vld [vmem:[%s0] sm:$0xff]
      %v60 = vld [vmem:[%s0 + $0x8] sm:$0xff]
      %61 = vadd.xlane.f32.xlu0 %v59
      %v62 = vpop.xlane.xlu0 %61
      %63 = vadd.xlane.f32.xlu0 %v60
      %v64 = vpop.xlane.xlu0 %63
      %v65 = vmul.f32 %v62, 0.03125
      %v66 = vmul.f32 %v64, 0.03125
      %v67 = vsub.f32 %v59, %v65
      %v68 = vsub.f32 %v60, %v66
      %v69 = vlaneseq
      %v70 = vand.u32 %v69, 127
      %vm71 = vcmp.lt.s32.totalorder %v70, 32
      %v72 = vsel %vm71, 1, 0
      %vm73 = vcmp.eq.s32.totalorder %v72, 1
      %v74 = vsel %vm73, %v67, 0.0
      %v75 = vsel %vm73, %v68, 0.0
      %v76 = vmul.f32 %v74, %v74
      %v77 = vmul.f32 %v75, %v75
      %78 = vadd.xlane.f32.xlu0 %v76
      %v79 = vpop.xlane.xlu0 %78
      %80 = vadd.xlane.f32.xlu0 %v77
      %v81 = vpop.xlane.xlu0 %80
      %v82 = vmul.f32 %v79, 0.03125
      %v83 = vmul.f32 %v81, 0.03125
      %v84 = vadd.f32 %v82, 1e-06
      %v85 = vadd.f32 %v83, 1e-06
      %v86 = vrsqrt.pop %v84
      %v87 = vrsqrt.pop %v85
      %v88 = vmul.f32 %v74, %v86
      %v89 = vmul.f32 %v75, %v87
      %v90 = vld [vmem:[%s1] sm:$0x1]
      %v92 = vlaneseq
      %v93 = vshrl.u32 %v92, 7
      %v94 = vsub.s32 0, %v93
      %v95 = vrot.slane %v90, %v94
      %v97 = vmul.f32 %v88, %v95
      %v98 = vmul.f32 %v89, %v95
      %v99 = vld [vmem:[%s2] sm:$0x1]
      %v101 = vlaneseq
      %v102 = vshrl.u32 %v101, 7
      %v103 = vsub.s32 0, %v102
      %v104 = vrot.slane %v99, %v103
      %v106 = vadd.f32 %v97, %v104
      %v107 = vadd.f32 %v98, %v104
      %v108 = vpack.c.bf16 %v107, %v106
      %109 = vst [vmem:[#allocation2] sm:$0xff] %v108
      %110 = vst [vmem:[#allocation3] sm:$0xff] 0.0
      %111 = vst [vmem:[#allocation3 + $0x8] sm:$0xff] 0.0
    $region41: #{positionwise_feed_forward.1} parent=1 // pred_fallthru
      _
    %v112 = vld [vmem:[#allocation2] sm:$0xff]
    %v113 = vld [vmem:[#allocation4] sm:$0xf]
    %v114 = vld [vmem:[#allocation4 + $0x4] sm:$0xf]
    %v115 = vld [vmem:[#allocation4 + $0x8] sm:$0xf]
    %v116 = vld [vmem:[#allocation4 + $0xc] sm:$0xf]
    %v117 = vld [vmem:[#allocation4 + $0x10] sm:$0xf]
    %v118 = vld [vmem:[#allocation4 + $0x14] sm:$0xf]
    %v119 = vld [vmem:[#allocation4 + $0x18] sm:$0xf]
    %v120 = vld [vmem:[#allocation4 + $0x1c] sm:$0xf]
    %v121 = vld [vmem:[#allocation4 + $0x20] sm:$0xf]
    %v122 = vld [vmem:[#allocation4 + $0x24] sm:$0xf]
    %v123 = vld [vmem:[#allocation4 + $0x28] sm:$0xf]
    %v124 = vld [vmem:[#allocation4 + $0x2c] sm:$0xf]
    %v125 = vld [vmem:[#allocation4 + $0x30] sm:$0xf]
    %v126 = vld [vmem:[#allocation4 + $0x34] sm:$0xf]
    %v127 = vld [vmem:[#allocation4 + $0x38] sm:$0xf]
    %v128 = vld [vmem:[#allocation4 + $0x3c] sm:$0xf]
    %v129 = vld [vmem:[%s4] sm:$0x1]
    %v131 = vlaneseq
    %v132 = vshrl.u32 %v131, 7
    %v133 = vsub.s32 0, %v132
    %v134 = vrot.slane %v129, %v133
    %v152 = vunpack.c.l.b16 %v113
    %v153 = vunpack.c.l.b16 %v114
    %v154 = vunpack.c.l.b16 %v115
    %v155 = vunpack.c.l.b16 %v116
    %v156 = vunpack.c.l.b16 %v117
    %v157 = vunpack.c.l.b16 %v118
    %v158 = vunpack.c.l.b16 %v119
    %v159 = vunpack.c.l.b16 %v120
    %v160 = vunpack.c.l.b16 %v121
    %v161 = vunpack.c.l.b16 %v122
    %v162 = vunpack.c.l.b16 %v123
    %v163 = vunpack.c.l.b16 %v124
    %v164 = vunpack.c.l.b16 %v125
    %v165 = vunpack.c.l.b16 %v126
    %v166 = vunpack.c.l.b16 %v127
    %v167 = vunpack.c.l.b16 %v128
    %v168 = vpack.c.b16 %v153, %v152
    %v169 = vpack.c.b16 %v155, %v154
    %v170 = vpack.c.b16 %v157, %v156
    %v171 = vpack.c.b16 %v159, %v158
    %v172 = vpack.c.b16 %v161, %v160
    %v173 = vpack.c.b16 %v163, %v162
    %v174 = vpack.c.b16 %v165, %v164
    %v175 = vpack.c.b16 %v167, %v166
    %184 = vmatprep.subr.bf16.mxu0 0
    %185 = vmatpush1.bf16.msra.mxu0 %v168
    %186 = vmatprep.subr.bf16.mxu0 0
    %187 = vmatpush1.bf16.msra.mxu0 %v169
    %188 = vmatprep.subr.bf16.mxu0 0
    %189 = vmatpush1.bf16.msra.mxu0 %v170
    %190 = vmatprep.subr.bf16.mxu0 0
    %191 = vmatpush1.bf16.msra.mxu0 %v171
    %192 = vmatprep.subr.bf16.mxu0 0
    %193 = vmatpush1.bf16.msra.mxu0 %v172
    %194 = vmatprep.subr.bf16.mxu0 0
    %195 = vmatpush1.bf16.msra.mxu0 %v173
    %196 = vmatprep.subr.bf16.mxu0 0
    %197 = vmatpush1.bf16.msra.mxu0 %v174
    %198 = vmatprep.subr.bf16.mxu0 0
    %199 = vmatpush1.bf16.msra.mxu0 %v175
    %200 = vmatprep.subr.bf16.mxu0 0
    %201 = vmatpush1.bf16.msra.mxu0 0
    %202 = vmatprep.subr.bf16.mxu0 0
    %203 = vmatpush1.bf16.msra.mxu0 0
    %204 = vmatprep.subr.bf16.mxu0 0
    %205 = vmatpush1.bf16.msra.mxu0 0
    %206 = vmatprep.subr.bf16.mxu0 0
    %207 = vmatpush1.bf16.msra.mxu0 0
    %208 = vmatprep.subr.bf16.mxu0 0
    %209 = vmatpush1.bf16.msra.mxu0 0
    %210 = vmatprep.subr.bf16.mxu0 0
    %211 = vmatpush1.bf16.msra.mxu0 0
    %212 = vmatprep.subr.bf16.mxu0 0
    %213 = vmatpush1.bf16.msra.mxu0 0
    %214 = vmatprep.subr.bf16.mxu0 0
    %215 = vmatpush1.bf16.msra.mxu0 0
    %216 = vmatprep.mubr.bf16.mxu0 0
    %217 = vmatmul.mubr.bf16.gmra.mrb[0].mxu0 %v112
    %v218 = vpop.f32.mrb[0].mxu0
    %v219 = vadd.f32 %v134, %v218
    %v220 = vpop.f32.mrb[0].mxu0
    %v221 = vpop.f32.mrb[0].mxu0
    %v222 = vadd.f32 %v134, %v221
    %v223 = vpop.f32.mrb[0].mxu0
    %224 = vdwg.mxu0
    %v225 = vmax.f32 %v219, 0.0
    %v226 = vmax.f32 %v222, 0.0
    %v227 = vld [vmem:[#allocation3] sm:$0xff]
    %v228 = vld [vmem:[#allocation3 + $0x8] sm:$0xff]
    %v229 = vpack.c.bf16 %v226, %v225
    %v230 = vld [vmem:[#allocation6] sm:$0xf]
    %v231 = vld [vmem:[#allocation6 + $0x4] sm:$0xf]
    %v232 = vld [vmem:[#allocation6 + $0x8] sm:$0xf]
    %v233 = vld [vmem:[#allocation6 + $0xc] sm:$0xf]
    %v234 = vld [vmem:[#allocation6 + $0x10] sm:$0xf]
    %v235 = vld [vmem:[#allocation6 + $0x14] sm:$0xf]
    %v236 = vld [vmem:[#allocation6 + $0x18] sm:$0xf]
    %v237 = vld [vmem:[#allocation6 + $0x1c] sm:$0xf]
    %v238 = vld [vmem:[#allocation6 + $0x20] sm:$0xf]
    %v239 = vld [vmem:[#allocation6 + $0x24] sm:$0xf]
    %v240 = vld [vmem:[#allocation6 + $0x28] sm:$0xf]
    %v241 = vld [vmem:[#allocation6 + $0x2c] sm:$0xf]
    %v242 = vld [vmem:[#allocation6 + $0x30] sm:$0xf]
    %v243 = vld [vmem:[#allocation6 + $0x34] sm:$0xf]
    %v244 = vld [vmem:[#allocation6 + $0x38] sm:$0xf]
    %v245 = vld [vmem:[#allocation6 + $0x3c] sm:$0xf]
    %v262 = vunpack.c.l.b16 %v230
    %v263 = vunpack.c.l.b16 %v231
    %v264 = vunpack.c.l.b16 %v232
    %v265 = vunpack.c.l.b16 %v233
    %v266 = vunpack.c.l.b16 %v234
    %v267 = vunpack.c.l.b16 %v235
    %v268 = vunpack.c.l.b16 %v236
    %v269 = vunpack.c.l.b16 %v237
    %v270 = vunpack.c.l.b16 %v238
    %v271 = vunpack.c.l.b16 %v239
    %v272 = vunpack.c.l.b16 %v240
    %v273 = vunpack.c.l.b16 %v241
    %v274 = vunpack.c.l.b16 %v242
    %v275 = vunpack.c.l.b16 %v243
    %v276 = vunpack.c.l.b16 %v244
    %v277 = vunpack.c.l.b16 %v245
    %v278 = vpack.c.b16 %v263, %v262
    %v279 = vpack.c.b16 %v265, %v264
    %v280 = vpack.c.b16 %v267, %v266
    %v281 = vpack.c.b16 %v269, %v268
    %v282 = vpack.c.b16 %v271, %v270
    %v283 = vpack.c.b16 %v273, %v272
    %v284 = vpack.c.b16 %v275, %v274
    %v285 = vpack.c.b16 %v277, %v276
    %294 = vmatprep.subr.bf16.mxu0 0
    %295 = vmatpush1.bf16.msra.mxu0 %v278
    %296 = vmatprep.subr.bf16.mxu0 0
    %297 = vmatpush1.bf16.msra.mxu0 %v279
    %298 = vmatprep.subr.bf16.mxu0 0
    %299 = vmatpush1.bf16.msra.mxu0 %v280
    %300 = vmatprep.subr.bf16.mxu0 0
    %301 = vmatpush1.bf16.msra.mxu0 %v281
    %302 = vmatprep.subr.bf16.mxu0 0
    %303 = vmatpush1.bf16.msra.mxu0 %v282
    %304 = vmatprep.subr.bf16.mxu0 0
    %305 = vmatpush1.bf16.msra.mxu0 %v283
    %306 = vmatprep.subr.bf16.mxu0 0
    %307 = vmatpush1.bf16.msra.mxu0 %v284
    %308 = vmatprep.subr.bf16.mxu0 0
    %309 = vmatpush1.bf16.msra.mxu0 %v285
    %310 = vmatprep.subr.bf16.mxu0 0
    %311 = vmatpush1.bf16.msra.mxu0 0
    %312 = vmatprep.subr.bf16.mxu0 0
    %313 = vmatpush1.bf16.msra.mxu0 0
    %314 = vmatprep.subr.bf16.mxu0 0
    %315 = vmatpush1.bf16.msra.mxu0 0
    %316 = vmatprep.subr.bf16.mxu0 0
    %317 = vmatpush1.bf16.msra.mxu0 0
    %318 = vmatprep.subr.bf16.mxu0 0
    %319 = vmatpush1.bf16.msra.mxu0 0
    %320 = vmatprep.subr.bf16.mxu0 0
    %321 = vmatpush1.bf16.msra.mxu0 0
    %322 = vmatprep.subr.bf16.mxu0 0
    %323 = vmatpush1.bf16.msra.mxu0 0
    %324 = vmatprep.subr.bf16.mxu0 0
    %325 = vmatpush1.bf16.msra.mxu0 0
    %326 = vmatprep.mubr.bf16.mxu0 0
    %327 = vmatmul.mubr.bf16.gmra.mrb[0].mxu0 %v229
    %v328 = vpop.f32.mrb[0].mxu0
    %v329 = vadd.f32 0.0, %v328
    %v330 = vpop.f32.mrb[0].mxu0
    %v331 = vpop.f32.mrb[0].mxu0
    %v332 = vadd.f32 0.0, %v331
    %v333 = vpop.f32.mrb[0].mxu0
    %334 = vdwg.mxu0
    %v335 = vadd.f32 %v227, %v329
    %v336 = vadd.f32 %v228, %v332
    %337 = vst [vmem:[#allocation3] sm:$0xff] %v335
    %338 = vst [vmem:[#allocation3 + $0x8] sm:$0xff] %v336
    // Predicated region
    $region42: #{positionwise_feed_forward.1} parent=1 // pred_check
      %p339 = pneg %p55
    $region43: #{positionwise_feed_forward.1} parent=1 // pred_check_branch
      %341 = sbr.rel (%p339) target = $region45
    $region44: #{positionwise_feed_forward.1} parent=1 // pred_region
      %v342 = vld [vmem:[#allocation3] sm:$0xff]
      %v343 = vld [vmem:[#allocation3 + $0x8] sm:$0xff]
      %v344 = vld [vmem:[%s6] sm:$0x1]
      %v346 = vlaneseq
      %v347 = vshrl.u32 %v346, 7
      %v348 = vsub.s32 0, %v347
      %v349 = vrot.slane %v344, %v348
      %v351 = vadd.f32 %v342, %v349
      %v352 = vadd.f32 %v343, %v349
      %v353 = vld [vmem:[%s0] sm:$0xff]
      %v354 = vld [vmem:[%s0 + $0x8] sm:$0xff]
      %v355 = vadd.f32 %v351, %v353
      %v356 = vadd.f32 %v352, %v354
      %357 = vst [vmem:[%s7] sm:$0xff] %v355
      %358 = vst [vmem:[%s7 + $0x8] sm:$0xff] %v356
    $region45: #{positionwise_feed_forward.1} parent=1 // pred_fallthru
      _
    // Predicated region
    $region46: #{positionwise_feed_forward.1} parent=1 // pred_check
      _
    $region47: #{positionwise_feed_forward.1} parent=1 // pred_check_branch
      %360 = sbr.rel (0) target = $region49
    $region48: #{positionwise_feed_forward.1} parent=1 // pred_region
      _
    $region49: #{positionwise_feed_forward.1} parent=1 // pred_fallthru
      _
    // Predicated region
    $region50: #{positionwise_feed_forward.1} parent=1 // pred_check
      _
    $region51: #{positionwise_feed_forward.1} parent=1 // pred_check_branch
      %362 = sbr.rel (0) target = $region53
    $region52: #{positionwise_feed_forward.1} parent=1 // pred_region
      _
    $region53: #{positionwise_feed_forward.1} parent=1 // pred_fallthru
      _
    %363 = vsyncpa [#allocation5], 1
    %364 = vsyncpa [#allocation7], 1

</llo_original>
